<compile_context>
chip_gen: v6e
topology: v6e:2x2x1
jax: 0.10.0
libtpu: 0.0.40
codegen_flags: <defaults>
</compile_context>

<pallas_src>
import jax
import jax.numpy as jnp
from jax.experimental import pallas as pl
from jax.experimental.pallas import tpu as pltpu


def _round_up(x: int, m: int) -> int:
    return ((x + m - 1) // m) * m


def _choose_b_tile(B: int, S_pad: int, target_block_bytes: int = 2 << 20) -> int:
    """Sublane-aligned batch tile sized so a rank block is ~target_block_bytes."""
    rows_budget = max(8, ((target_block_bytes // (4 * S_pad)) // 8) * 8)
    b8 = _round_up(B, 8)
    b_tile = min(rows_budget, b8)
    # Prefer >= 2 grid steps so both v7x TensorCores get work.
    if b_tile >= b8 and b8 >= 16:
        b_tile = _round_up((b8 + 1) // 2, 8)
    return b_tile


def _uniform_mask_kernel(rank_ref, n_ref, mask_ref):
    """mask[b, s] = 1.0 iff rank[b, s] < n[b]  (i.e. s is in orders[b, :n_b])."""
    # rank_ref: (b_tile, S_pad) int32, n_ref: (b_tile, 1) int32,
    # mask_ref: (b_tile, S_pad) f32.  Lane broadcast + compare + cast on VPU.
    mask_ref[...] = (rank_ref[...] < n_ref[...]).astype(mask_ref.dtype)


def uniform_mask_generator(patches, orders, seed=0):
    """Pallas TPU equivalent of UniformMaskGenerator.forward.

    patches: (B, S, H) -- only the shape is used (as in the reference module).
    orders:  (B, S) int32 permutation of [0, S) per row.
    returns: (B, S) float32 mask; a random-length prefix of each row's order
             is scattered to 1.
    """
    B, S, _ = patches.shape
    orders = orders.astype(jnp.int32)

    # Lane-dense last dim; VMEM-budgeted, sublane-aligned batch tile.
    S_pad = _round_up(S, 128)
    b_tile = _choose_b_tile(B, S_pad)
    B_pad = _round_up(B, b_tile)
    grid = (B_pad // b_tile,)

    # Per-row number of masked tokens, n_b ~ Uniform{1..S}. The torch module
    # draws from the global RNG each forward; here callers vary `seed`.
    # TODO(synk): stateful global-RNG semantics have no clean Pallas equivalent;
    # callers must thread a fresh seed per step to match training behavior.
    key = jax.random.PRNGKey(seed)
    n = jax.random.randint(key, (B, 1), 1, S + 1, dtype=jnp.int32)
    n = jnp.pad(n, ((0, B_pad - B), (0, 0)))  # padded rows discarded anyway

    # Inverse permutation via one O(B*S) scatter (no argsort), written straight
    # into the padded, lane-dense buffer. Padding is filled with S_pad >= n_b,
    # so padded positions always compare to 0.
    iota_j = jnp.arange(S, dtype=jnp.int32)
    batch_idx = jnp.arange(B, dtype=jnp.int32)[:, None]
    rank = jnp.full((B_pad, S_pad), S_pad, dtype=jnp.int32)
    rank = rank.at[batch_idx, orders].set(
        jnp.broadcast_to(iota_j, (B, S)), unique_indices=True
    )

    mask_pad = pl.pallas_call(
        _uniform_mask_kernel,
        out_shape=jax.ShapeDtypeStruct((B_pad, S_pad), jnp.float32),
        grid=grid,
        in_specs=[
            pl.BlockSpec((b_tile, S_pad), lambda i: (i, 0)),  # rank
            pl.BlockSpec((b_tile, 1), lambda i: (i, 0)),      # n (per-row count)
        ],
        out_specs=pl.BlockSpec((b_tile, S_pad), lambda i: (i, 0)),
        compiler_params=pltpu.CompilerParams(
            dimension_semantics=("parallel",),
            vmem_limit_bytes=32 << 20,
        ),
    )(rank, n)

    return mask_pad[:B, :S]


if __name__ == "__main__":
    B, S, H = 2, 16, 32

    key = jax.random.PRNGKey(0)
    k_patch, k_orders = jax.random.split(key)

    patches = jax.random.normal(k_patch, (B, S, H), dtype=jnp.float32)
    perm_keys = jax.random.split(k_orders, B)
    orders = jnp.stack(
        [jax.random.permutation(pk, S) for pk in perm_keys]
    ).astype(jnp.int32)

    mask = uniform_mask_generator(patches, orders, seed=0)
    mask = jax.block_until_ready(mask)

    # --- sanity check: mask is exactly the first-n_b prefix of each row's order ---
    mask_np = jax.device_get(mask)
    orders_np = jax.device_get(orders)
    assert mask_np.shape == (B, S) and mask_np.dtype == jnp.float32
    for b in range(B):
        row = mask_np[b]
        assert set(float(v) for v in row) <= {0.0, 1.0}
        n_b = int(row.sum())
        assert 1 <= n_b <= S, f"row {b}: n_b={n_b} out of range"
        expected = set(int(x) for x in orders_np[b, :n_b])
        actual = set(int(i) for i in range(S) if row[i] == 1.0)
        assert expected == actual, f"row {b}: scatter mismatch"

    print("KERNEL_OK")
</pallas_src>

<mosaic_0001>
module attributes {stable_mosaic.version = 11 : i64} {
  func.func @_uniform_mask_kernel(%arg0: i32, %arg1: memref<8x128xi32, #tpu.memory_space<vmem>>, %arg2: memref<8x1xi32, #tpu.memory_space<vmem>>, %arg3: memref<8x128xf32, #tpu.memory_space<vmem>>) attributes {dimension_semantics = [#tpu.dimension_semantics<parallel>], iteration_bounds = array<i64: 1>, scalar_prefetch = 0 : i64, scratch_operands = 0 : i64, tpu.core_type = #tpu.core_type<tc>, window_params = [{transform_indices = @transform_0, window_bounds = array<i64: 8, 128>}, {transform_indices = @transform_1, window_bounds = array<i64: 8, 1>}, {transform_indices = @transform_2, window_bounds = array<i64: 8, 128>}]} {
    %c0 = arith.constant 0 : index
    %c0_0 = arith.constant 0 : index
    %0 = vector.load %arg1[%c0, %c0_0] : memref<8x128xi32, #tpu.memory_space<vmem>>, vector<8x128xi32>
    %c0_1 = arith.constant 0 : index
    %c0_2 = arith.constant 0 : index
    %1 = vector.load %arg2[%c0_1, %c0_2] : memref<8x1xi32, #tpu.memory_space<vmem>>, vector<8x1xi32>
    %2 = vector.broadcast %1 : vector<8x1xi32> to vector<8x128xi32>
    %3 = arith.cmpi slt, %0, %2 : vector<8x128xi32>
    %4 = arith.extui %3 : vector<8x128xi1> to vector<8x128xi32>
    %5 = arith.sitofp %4 : vector<8x128xi32> to vector<8x128xf32>
    %c0_3 = arith.constant 0 : index
    %c0_4 = arith.constant 0 : index
    %6 = vector.load %arg3[%c0_3, %c0_4] : memref<8x128xf32, #tpu.memory_space<vmem>>, vector<8x128xf32>
    tpu.vector_store %arg3[%c0_3, %c0_4], %5 {strides = array<i32>} : memref<8x128xf32, #tpu.memory_space<vmem>>, vector<8x128xf32>,
    return
  }
  func.func @transform_0(%arg0: i32) -> (i32, i32) {
    %c0_i32 = arith.constant 0 : i32
    %c0_i32_0 = arith.constant 0 : i32
    return %arg0, %c0_i32 : i32, i32
  }
  func.func @transform_1(%arg0: i32) -> (i32, i32) {
    %c0_i32 = arith.constant 0 : i32
    %c0_i32_0 = arith.constant 0 : i32
    return %arg0, %c0_i32 : i32, i32
  }
  func.func @transform_2(%arg0: i32) -> (i32, i32) {
    %c0_i32 = arith.constant 0 : i32
    %c0_i32_0 = arith.constant 0 : i32
    return %arg0, %c0_i32 : i32, i32
  }
}

</mosaic_0001>

<llo_original>
// kernel: tpu_custom_call.1
$region0: #{tpu_custom_call.1}
  #allocation0 [shape = 'u32[]', space=smem, size = 0x4, offset = 0x4, fixed_abs, tag = 'smem constant byte address 0x4 - core index']
  #allocation1 [shape = 'u32[144,128]{1,0:T(1,128)}', space=vmem, size = 0x12000, scoped, tag = 'internal scratch']
  %s0 = inlined_call_operand.vmem [shape: s32[8,128], index: 0, kind: input, shape index: {}]
  %s1 = inlined_call_operand.vmem [shape: s32[8,1], index: 1, kind: input, shape index: {}]
  %s2 = inlined_call_operand.hbm [shape: f32[8,128], index: 2, kind: output, shape index: {}]
  %s3 = sld [smem:[#allocation0]]
  $region18: #{tpu_custom_call.1} parent=0
    _
  %s5 = ssub.s32 1, %s3
  %s6 = scalar_select 0, %s5, %s3
  $region1: #{tpu_custom_call.1} parent=0
    #allocation2 [shape = 'u8[4096]{0}', space=vmem, size = 0x1000, scoped, tag = 'output window, operand 0, single buffered']
    #allocation3 [shape = 's32[1]{0}', space=sflag, size = 0x4, scoped, tag = 'scoped memory for tpu_custom_call.1']
    %7 = vsyncpa [#allocation3], 0
    // Predicated region
    $region2: #{tpu_custom_call.1} parent=1 // pred_check
      _
    $region3: #{tpu_custom_call.1} parent=1 // pred_check_branch
      %9 = sbr.rel (0) target = $region5
    $region4: #{tpu_custom_call.1} parent=1 // pred_region
      _
    $region5: #{tpu_custom_call.1} parent=1 // pred_fallthru
      _
    // Predicated region
    $region6: #{tpu_custom_call.1} parent=1 // pred_check
      _
    $region7: #{tpu_custom_call.1} parent=1 // pred_check_branch
      %11 = sbr.rel (0) target = $region9
    $region8: #{tpu_custom_call.1} parent=1 // pred_region
      _
    $region9: #{tpu_custom_call.1} parent=1 // pred_fallthru
      _
    %v12 = vld [vmem:[%s0] sm:$0xff]
    %v13 = vld [vmem:[%s1] sm:$0xff]
    %14 = vset.pattern.permute.xlu0 0
    %15 = vperm.xlu0 %14, %v13
    %v16 = vpop.permute.xlu0 %15
    %vm17 = vcmp.lt.s32.totalorder %v12, %v16
    %v18 = vsel %vm17, 1, 0
    %v19 = vcvt.s32.f32 %v18
    %20 = vst [vmem:[#allocation2] sm:$0xff] %v19
    // Predicated region
    $region10: #{tpu_custom_call.1} parent=1 // pred_check
      _
    $region11: #{tpu_custom_call.1} parent=1 // pred_check_branch
      %22 = sbr.rel (0) target = $region13
    $region12: #{tpu_custom_call.1} parent=1 // pred_region
      %s24 = ssub.s32 128, 128
      %25 = vsyncadd [#allocation3], %s24
      %s27 = sshll.u32 [#allocation2], 4
      %s28 = int_to_ptr.vmem [resolvable:$true] %s27
      %30 = dma.vmem_to_hbm [thread:$0]  %s28, 128, %s2, [#allocation3]
    $region13: #{tpu_custom_call.1} parent=1 // pred_fallthru
      _
    // Predicated region
    $region14: #{tpu_custom_call.1} parent=1 // pred_check
      _
    $region15: #{tpu_custom_call.1} parent=1 // pred_check_branch
      %32 = sbr.rel (0) target = $region17
    $region16: #{tpu_custom_call.1} parent=1 // pred_region
      %33 = dma.done [#allocation3], 128
    $region17: #{tpu_custom_call.1} parent=1 // pred_fallthru
      _
    %34 = vsyncpa [#allocation3], 1

</llo_original>
